<compile_context>
chip_gen: v6e
topology: v6e:2x2x1
jax: 0.10.0
libtpu: 0.0.40
codegen_flags: <defaults>
</compile_context>

<pallas_src>
import functools
import itertools

import numpy as np

import jax
import jax.numpy as jnp
from jax import lax
from jax.experimental import pallas as pl
from jax.experimental.pallas import tpu as pltpu


def _round_up(x, m):
    return ((x + m - 1) // m) * m


def _emd_kernel(pT_ref, tT_ref, tbl_ref, out_ref, *, p_chunk):
    """One batch tile: optimal-matching cost summed over the tile.

    pT_ref:  (N, TB, D)  preds, point index leading (transposed in the wrapper)
    tT_ref:  (N, TB, D)  targets, point index leading
    tbl_ref: (N*N, Ppad) bf16 one-hot permutation table, row i*N + j, column p
    out_ref: (1, 1, 1)   per-block partial sum of min-matching costs
    """
    N, TB, D = pT_ref.shape
    _, Ppad = tbl_ref.shape
    f32 = jnp.float32

    # Target point rows: load once (free leading-dim ref loads) and accumulate the
    # permutation-invariant |t|^2 term in f32 on the VPU.
    t_rows = []
    t_sq = jnp.zeros((TB, 1), f32)
    for j in range(N):
        tj = tT_ref[j].astype(f32)                                   # (TB, D)
        t_rows.append(tj)
        t_sq = t_sq + jnp.sum(tj * tj, axis=-1, keepdims=True)

    # Cross terms <p_i, t_j>, built directly in lane-flattened order i*N + j so the
    # permutation search is a plain 2-D MXU matmul (no batched-3D reshape/relayout
    # inside the kernel).  Op count here is O(N^2), independent of TB.
    p_sq = jnp.zeros((TB, 1), f32)
    pieces = []
    for i in range(N):
        pi = pT_ref[i].astype(f32)                                   # (TB, D)
        p_sq = p_sq + jnp.sum(pi * pi, axis=-1, keepdims=True)
        for j in range(N):
            pieces.append(jnp.sum(pi * t_rows[j], axis=-1, keepdims=True))   # (TB, 1)
    lhs = jnp.concatenate(pieces, axis=-1).astype(tbl_ref.dtype)     # (TB, N*N) bf16

    # Brute-force permutation search as chunked bf16 MXU matmuls + a running lane-max,
    # so the (TB, P) scores intermediate never materializes:
    #   scores[b, p] = sum_i <p_i, t_perm_p(i)>
    best = jnp.full((TB, 1), -jnp.inf, dtype=f32)
    n_chunks = Ppad // p_chunk
    for c in range(n_chunks):                                        # static, small trip count
        tbl_c = tbl_ref[:, c * p_chunk:(c + 1) * p_chunk]            # (N*N, chunk) bf16
        sc = lax.dot_general(lhs, tbl_c, (((1,), (0,)), ((), ())),
                             preferred_element_type=f32)             # (TB, chunk) f32 accum
        best = jnp.maximum(best, jnp.max(sc, axis=-1, keepdims=True))

    # Min matching cost per element: |p|^2 + |t|^2 (permutation invariant) - 2 * best cross.
    cost = p_sq + t_sq - 2.0 * best                                  # (TB, 1)
    out_ref[...] = jnp.sum(cost, axis=0, keepdims=True)[None]        # (1, 1, 1)


def emd(preds, targets, *, tb=256, p_chunk=4096):
    """Pallas EMD: sum over batch of the min-permutation matching cost (brute force, N <= 8)."""
    assert preds.ndim == 3 and targets.shape == preds.shape, "preds/targets must have equal (B,N,D) shapes"
    B, N, D = preds.shape
    if N > 8:
        # TODO(synk): for N >= 9 the bf16 factorial table (~59 MiB) no longer fits VMEM;
        # stream it from HBM with a 2-D grid (P-blocks outer 'arbitrary', batch-blocks inner
        # 'parallel') and a revisited running-max output block initialized under pl.when.
        raise NotImplementedError("emd Pallas kernel supports N <= 8 points per cloud")
    assert p_chunk % 128 == 0

    # Host-built one-hot permutation table, flattened row-major on (i, j).  bf16 is exact
    # for 0/1 and halves the VMEM footprint.
    perms = np.array(list(itertools.permutations(range(N))), dtype=np.int32)   # (P, N)
    P = perms.shape[0]
    onehot = np.eye(N, dtype=np.float32)[perms]                                # (P, N, N)
    tbl_np = np.transpose(onehot, (1, 2, 0)).reshape(N * N, P)                 # (N*N, P)
    Ppad = _round_up(P, 128)
    chunk = p_chunk if Ppad > p_chunk else Ppad
    Ppad = _round_up(Ppad, chunk)
    if Ppad != P:
        # Pad with duplicates of a *real* permutation column so the lane-max is unaffected.
        tbl_np = np.concatenate([tbl_np, np.tile(tbl_np[:, :1], (1, Ppad - P))], axis=1)
    tbl = jnp.asarray(tbl_np, dtype=jnp.bfloat16)                              # (N*N, Ppad)

    # Batch tiling: point index leading (cheap leading-dim ref loads), batch on the sublane
    # axis, rounded to a multiple of 8 and zero-padded (padded rows contribute exactly 0).
    tb = _round_up(max(8, min(int(tb), _round_up(B, 8))), 8)
    nb = pl.cdiv(B, tb)
    b_pad = nb * tb
    pT = jnp.transpose(preds, (1, 0, 2))                                       # (N, B, D)
    tT = jnp.transpose(targets, (1, 0, 2))
    if b_pad != B:
        pad = ((0, 0), (0, b_pad - B), (0, 0))
        pT = jnp.pad(pT, pad)
        tT = jnp.pad(tT, pad)

    # VMEM budget (table counted twice in case the grid-invariant input is double-buffered);
    # only raise the scoped limit when needed, and never above ~75% of physical VMEM.
    itemsize = jnp.dtype(preds.dtype).itemsize
    need = (2 * (N * N) * Ppad * 2            # bf16 table (x2 for possible double-buffering)
            + 2 * 2 * tb * N * D * itemsize   # two inputs, double-buffered
            + tb * (N * N) * 4                # flattened cross terms
            + tb * chunk * 4                  # one f32 scores chunk
            + (2 << 20))                      # headroom
    cp_kwargs = dict(dimension_semantics=("parallel",))
    if need > (16 << 20):
        try:
            phys = pltpu.get_tpu_info().vmem_capacity_bytes
        except Exception:
            phys = 64 << 20
        cp_kwargs["vmem_limit_bytes"] = int(min(max(need, 32 << 20), (phys * 3) // 4))
    compiler_params = pltpu.CompilerParams(**cp_kwargs)

    partials = pl.pallas_call(
        functools.partial(_emd_kernel, p_chunk=chunk),
        out_shape=jax.ShapeDtypeStruct((nb, 1, 1), jnp.float32),
        grid=(nb,),
        in_specs=[
            pl.BlockSpec((N, tb, D), lambda g: (0, g, 0)),
            pl.BlockSpec((N, tb, D), lambda g: (0, g, 0)),
            pl.BlockSpec((N * N, Ppad), lambda g: (0, 0)),   # grid-invariant, VMEM-resident
        ],
        out_specs=pl.BlockSpec((1, 1, 1), lambda g: (g, 0, 0)),
        compiler_params=compiler_params,
    )(pT, tT, tbl)

    return jnp.sum(partials)


def _emd_ref(preds, targets):
    """Pure-JAX f32 reference (same brute force as the torch module)."""
    p1_norm = jnp.sum(preds ** 2, axis=-1)[..., :, None]
    p2_norm = jnp.sum(targets ** 2, axis=-1)[..., None, :]
    pwdist = p1_norm + p2_norm - 2.0 * jnp.einsum("bnd,bmd->bnm", preds, targets)
    N = preds.shape[1]
    perms = jnp.array(list(itertools.permutations(range(N))))            # (P, N)
    gathered = jnp.take_along_axis(
        pwdist[:, None, :, :],                                           # (B, 1, N, N)
        perms[None, :, :, None],                                         # (1, P, N, 1)
        axis=-1)[..., 0]                                                 # (B, P, N)
    costs = jnp.sum(gathered, axis=-1)                                   # (B, P)
    return jnp.sum(jnp.min(costs, axis=-1))


if __name__ == "__main__":
    key = jax.random.PRNGKey(0)
    k1, k2 = jax.random.split(key)
    B, N, D = 2, 4, 8  # small: N! = 24 permutations
    preds = jax.random.normal(k1, (B, N, D), dtype=jnp.float32)
    targets = jax.random.normal(k2, (B, N, D), dtype=jnp.float32)

    out = emd(preds, targets)
    jax.block_until_ready(out)

    ref = _emd_ref(preds, targets)
    # The permutation-search matmul operands go through bf16 (exact one-hot table,
    # bf16-rounded cross terms), so compare with a correspondingly relaxed tolerance.
    assert jnp.allclose(out, ref, rtol=1e-2, atol=1e-2), (out, ref)

    print("KERNEL_OK")
</pallas_src>

<mosaic_0001>
module attributes {stable_mosaic.version = 11 : i64} {
  func.func @_emd_kernel(%arg0: i32, %arg1: memref<4x8x8xf32, #tpu.memory_space<vmem>>, %arg2: memref<4x8x8xf32, #tpu.memory_space<vmem>>, %arg3: memref<16x128xbf16, #tpu.memory_space<vmem>>, %arg4: memref<1x1x1xf32, #tpu.memory_space<vmem>>) attributes {dimension_semantics = [#tpu.dimension_semantics<parallel>], iteration_bounds = array<i64: 1>, scalar_prefetch = 0 : i64, scratch_operands = 0 : i64, tpu.core_type = #tpu.core_type<tc>, window_params = [{transform_indices = @transform_0, window_bounds = array<i64: 4, 8, 8>}, {transform_indices = @transform_1, window_bounds = array<i64: 4, 8, 8>}, {pipeline_mode = #tpu.pipeline_mode<synchronous>, transform_indices = @transform_2, window_bounds = array<i64: 16, 128>}, {transform_indices = @transform_3, window_bounds = array<i64: 1, 1, 1>}]} {
    %cst = arith.constant 0.000000e+00 : f32
    %0 = vector.broadcast %cst : f32 to vector<8x1xf32>
    %c0 = arith.constant 0 : index
    %c0_0 = arith.constant 0 : index
    %c0_1 = arith.constant 0 : index
    %1 = vector.load %arg2[%c0, %c0_0, %c0_1] : memref<4x8x8xf32, #tpu.memory_space<vmem>>, vector<1x8x8xf32>
    %2 = vector.shape_cast %1 : vector<1x8x8xf32> to vector<8x8xf32>
    %3 = arith.mulf %2, %2 : vector<8x8xf32>
    %cst_2 = arith.constant dense<0.000000e+00> : vector<8xf32>
    %4 = vector.multi_reduction <add>, %3, %cst_2 [1] : vector<8x8xf32> to vector<8xf32>
    %5 = vector.shape_cast %4 : vector<8xf32> to vector<8x1xf32>
    %6 = arith.addf %0, %5 : vector<8x1xf32>
    %c1 = arith.constant 1 : index
    %c0_3 = arith.constant 0 : index
    %c0_4 = arith.constant 0 : index
    %7 = vector.load %arg2[%c1, %c0_3, %c0_4] : memref<4x8x8xf32, #tpu.memory_space<vmem>>, vector<1x8x8xf32>
    %8 = vector.shape_cast %7 : vector<1x8x8xf32> to vector<8x8xf32>
    %9 = arith.mulf %8, %8 : vector<8x8xf32>
    %cst_5 = arith.constant dense<0.000000e+00> : vector<8xf32>
    %10 = vector.multi_reduction <add>, %9, %cst_5 [1] : vector<8x8xf32> to vector<8xf32>
    %11 = vector.shape_cast %10 : vector<8xf32> to vector<8x1xf32>
    %12 = arith.addf %6, %11 : vector<8x1xf32>
    %c2 = arith.constant 2 : index
    %c0_6 = arith.constant 0 : index
    %c0_7 = arith.constant 0 : index
    %13 = vector.load %arg2[%c2, %c0_6, %c0_7] : memref<4x8x8xf32, #tpu.memory_space<vmem>>, vector<1x8x8xf32>
    %14 = vector.shape_cast %13 : vector<1x8x8xf32> to vector<8x8xf32>
    %15 = arith.mulf %14, %14 : vector<8x8xf32>
    %cst_8 = arith.constant dense<0.000000e+00> : vector<8xf32>
    %16 = vector.multi_reduction <add>, %15, %cst_8 [1] : vector<8x8xf32> to vector<8xf32>
    %17 = vector.shape_cast %16 : vector<8xf32> to vector<8x1xf32>
    %18 = arith.addf %12, %17 : vector<8x1xf32>
    %c3 = arith.constant 3 : index
    %c0_9 = arith.constant 0 : index
    %c0_10 = arith.constant 0 : index
    %19 = vector.load %arg2[%c3, %c0_9, %c0_10] : memref<4x8x8xf32, #tpu.memory_space<vmem>>, vector<1x8x8xf32>
    %20 = vector.shape_cast %19 : vector<1x8x8xf32> to vector<8x8xf32>
    %21 = arith.mulf %20, %20 : vector<8x8xf32>
    %cst_11 = arith.constant dense<0.000000e+00> : vector<8xf32>
    %22 = vector.multi_reduction <add>, %21, %cst_11 [1] : vector<8x8xf32> to vector<8xf32>
    %23 = vector.shape_cast %22 : vector<8xf32> to vector<8x1xf32>
    %24 = arith.addf %18, %23 : vector<8x1xf32>
    %cst_12 = arith.constant 0.000000e+00 : f32
    %25 = vector.broadcast %cst_12 : f32 to vector<8x1xf32>
    %c0_13 = arith.constant 0 : index
    %c0_14 = arith.constant 0 : index
    %c0_15 = arith.constant 0 : index
    %26 = vector.load %arg1[%c0_13, %c0_14, %c0_15] : memref<4x8x8xf32, #tpu.memory_space<vmem>>, vector<1x8x8xf32>
    %27 = vector.shape_cast %26 : vector<1x8x8xf32> to vector<8x8xf32>
    %28 = arith.mulf %27, %27 : vector<8x8xf32>
    %cst_16 = arith.constant dense<0.000000e+00> : vector<8xf32>
    %29 = vector.multi_reduction <add>, %28, %cst_16 [1] : vector<8x8xf32> to vector<8xf32>
    %30 = vector.shape_cast %29 : vector<8xf32> to vector<8x1xf32>
    %31 = arith.addf %25, %30 : vector<8x1xf32>
    %32 = arith.mulf %27, %2 : vector<8x8xf32>
    %cst_17 = arith.constant dense<0.000000e+00> : vector<8xf32>
    %33 = vector.multi_reduction <add>, %32, %cst_17 [1] : vector<8x8xf32> to vector<8xf32>
    %34 = vector.shape_cast %33 : vector<8xf32> to vector<8x1xf32>
    %35 = arith.mulf %27, %8 : vector<8x8xf32>
    %cst_18 = arith.constant dense<0.000000e+00> : vector<8xf32>
    %36 = vector.multi_reduction <add>, %35, %cst_18 [1] : vector<8x8xf32> to vector<8xf32>
    %37 = vector.shape_cast %36 : vector<8xf32> to vector<8x1xf32>
    %38 = arith.mulf %27, %14 : vector<8x8xf32>
    %cst_19 = arith.constant dense<0.000000e+00> : vector<8xf32>
    %39 = vector.multi_reduction <add>, %38, %cst_19 [1] : vector<8x8xf32> to vector<8xf32>
    %40 = vector.shape_cast %39 : vector<8xf32> to vector<8x1xf32>
    %41 = arith.mulf %27, %20 : vector<8x8xf32>
    %cst_20 = arith.constant dense<0.000000e+00> : vector<8xf32>
    %42 = vector.multi_reduction <add>, %41, %cst_20 [1] : vector<8x8xf32> to vector<8xf32>
    %43 = vector.shape_cast %42 : vector<8xf32> to vector<8x1xf32>
    %c1_21 = arith.constant 1 : index
    %c0_22 = arith.constant 0 : index
    %c0_23 = arith.constant 0 : index
    %44 = vector.load %arg1[%c1_21, %c0_22, %c0_23] : memref<4x8x8xf32, #tpu.memory_space<vmem>>, vector<1x8x8xf32>
    %45 = vector.shape_cast %44 : vector<1x8x8xf32> to vector<8x8xf32>
    %46 = arith.mulf %45, %45 : vector<8x8xf32>
    %cst_24 = arith.constant dense<0.000000e+00> : vector<8xf32>
    %47 = vector.multi_reduction <add>, %46, %cst_24 [1] : vector<8x8xf32> to vector<8xf32>
    %48 = vector.shape_cast %47 : vector<8xf32> to vector<8x1xf32>
    %49 = arith.addf %31, %48 : vector<8x1xf32>
    %50 = arith.mulf %45, %2 : vector<8x8xf32>
    %cst_25 = arith.constant dense<0.000000e+00> : vector<8xf32>
    %51 = vector.multi_reduction <add>, %50, %cst_25 [1] : vector<8x8xf32> to vector<8xf32>
    %52 = vector.shape_cast %51 : vector<8xf32> to vector<8x1xf32>
    %53 = arith.mulf %45, %8 : vector<8x8xf32>
    %cst_26 = arith.constant dense<0.000000e+00> : vector<8xf32>
    %54 = vector.multi_reduction <add>, %53, %cst_26 [1] : vector<8x8xf32> to vector<8xf32>
    %55 = vector.shape_cast %54 : vector<8xf32> to vector<8x1xf32>
    %56 = arith.mulf %45, %14 : vector<8x8xf32>
    %cst_27 = arith.constant dense<0.000000e+00> : vector<8xf32>
    %57 = vector.multi_reduction <add>, %56, %cst_27 [1] : vector<8x8xf32> to vector<8xf32>
    %58 = vector.shape_cast %57 : vector<8xf32> to vector<8x1xf32>
    %59 = arith.mulf %45, %20 : vector<8x8xf32>
    %cst_28 = arith.constant dense<0.000000e+00> : vector<8xf32>
    %60 = vector.multi_reduction <add>, %59, %cst_28 [1] : vector<8x8xf32> to vector<8xf32>
    %61 = vector.shape_cast %60 : vector<8xf32> to vector<8x1xf32>
    %c2_29 = arith.constant 2 : index
    %c0_30 = arith.constant 0 : index
    %c0_31 = arith.constant 0 : index
    %62 = vector.load %arg1[%c2_29, %c0_30, %c0_31] : memref<4x8x8xf32, #tpu.memory_space<vmem>>, vector<1x8x8xf32>
    %63 = vector.shape_cast %62 : vector<1x8x8xf32> to vector<8x8xf32>
    %64 = arith.mulf %63, %63 : vector<8x8xf32>
    %cst_32 = arith.constant dense<0.000000e+00> : vector<8xf32>
    %65 = vector.multi_reduction <add>, %64, %cst_32 [1] : vector<8x8xf32> to vector<8xf32>
    %66 = vector.shape_cast %65 : vector<8xf32> to vector<8x1xf32>
    %67 = arith.addf %49, %66 : vector<8x1xf32>
    %68 = arith.mulf %63, %2 : vector<8x8xf32>
    %cst_33 = arith.constant dense<0.000000e+00> : vector<8xf32>
    %69 = vector.multi_reduction <add>, %68, %cst_33 [1] : vector<8x8xf32> to vector<8xf32>
    %70 = vector.shape_cast %69 : vector<8xf32> to vector<8x1xf32>
    %71 = arith.mulf %63, %8 : vector<8x8xf32>
    %cst_34 = arith.constant dense<0.000000e+00> : vector<8xf32>
    %72 = vector.multi_reduction <add>, %71, %cst_34 [1] : vector<8x8xf32> to vector<8xf32>
    %73 = vector.shape_cast %72 : vector<8xf32> to vector<8x1xf32>
    %74 = arith.mulf %63, %14 : vector<8x8xf32>
    %cst_35 = arith.constant dense<0.000000e+00> : vector<8xf32>
    %75 = vector.multi_reduction <add>, %74, %cst_35 [1] : vector<8x8xf32> to vector<8xf32>
    %76 = vector.shape_cast %75 : vector<8xf32> to vector<8x1xf32>
    %77 = arith.mulf %63, %20 : vector<8x8xf32>
    %cst_36 = arith.constant dense<0.000000e+00> : vector<8xf32>
    %78 = vector.multi_reduction <add>, %77, %cst_36 [1] : vector<8x8xf32> to vector<8xf32>
    %79 = vector.shape_cast %78 : vector<8xf32> to vector<8x1xf32>
    %c3_37 = arith.constant 3 : index
    %c0_38 = arith.constant 0 : index
    %c0_39 = arith.constant 0 : index
    %80 = vector.load %arg1[%c3_37, %c0_38, %c0_39] : memref<4x8x8xf32, #tpu.memory_space<vmem>>, vector<1x8x8xf32>
    %81 = vector.shape_cast %80 : vector<1x8x8xf32> to vector<8x8xf32>
    %82 = arith.mulf %81, %81 : vector<8x8xf32>
    %cst_40 = arith.constant dense<0.000000e+00> : vector<8xf32>
    %83 = vector.multi_reduction <add>, %82, %cst_40 [1] : vector<8x8xf32> to vector<8xf32>
    %84 = vector.shape_cast %83 : vector<8xf32> to vector<8x1xf32>
    %85 = arith.addf %67, %84 : vector<8x1xf32>
    %86 = arith.mulf %81, %2 : vector<8x8xf32>
    %cst_41 = arith.constant dense<0.000000e+00> : vector<8xf32>
    %87 = vector.multi_reduction <add>, %86, %cst_41 [1] : vector<8x8xf32> to vector<8xf32>
    %88 = vector.shape_cast %87 : vector<8xf32> to vector<8x1xf32>
    %89 = arith.mulf %81, %8 : vector<8x8xf32>
    %cst_42 = arith.constant dense<0.000000e+00> : vector<8xf32>
    %90 = vector.multi_reduction <add>, %89, %cst_42 [1] : vector<8x8xf32> to vector<8xf32>
    %91 = vector.shape_cast %90 : vector<8xf32> to vector<8x1xf32>
    %92 = arith.mulf %81, %14 : vector<8x8xf32>
    %cst_43 = arith.constant dense<0.000000e+00> : vector<8xf32>
    %93 = vector.multi_reduction <add>, %92, %cst_43 [1] : vector<8x8xf32> to vector<8xf32>
    %94 = vector.shape_cast %93 : vector<8xf32> to vector<8x1xf32>
    %95 = arith.mulf %81, %20 : vector<8x8xf32>
    %cst_44 = arith.constant dense<0.000000e+00> : vector<8xf32>
    %96 = vector.multi_reduction <add>, %95, %cst_44 [1] : vector<8x8xf32> to vector<8xf32>
    %97 = vector.shape_cast %96 : vector<8xf32> to vector<8x1xf32>
    %98 = tpu.concatenate %34, %37, %40, %43, %52, %55, %58, %61, %70, %73, %76, %79, %88, %91, %94, %97 in 1 : vector<8x1xf32>, vector<8x1xf32>, vector<8x1xf32>, vector<8x1xf32>, vector<8x1xf32>, vector<8x1xf32>, vector<8x1xf32>, vector<8x1xf32>, vector<8x1xf32>, vector<8x1xf32>, vector<8x1xf32>, vector<8x1xf32>, vector<8x1xf32>, vector<8x1xf32>, vector<8x1xf32>, vector<8x1xf32> -> vector<8x16xf32>
    %99 = arith.truncf %98 : vector<8x16xf32> to vector<8x16xbf16>
    %cst_45 = arith.constant 0xFF800000 : f32
    %100 = vector.broadcast %cst_45 : f32 to vector<8x1xf32>
    %c0_46 = arith.constant 0 : index
    %c0_47 = arith.constant 0 : index
    %101 = vector.load %arg3[%c0_46, %c0_47] : memref<16x128xbf16, #tpu.memory_space<vmem>>, vector<16x128xbf16>
    %cst_48 = arith.constant dense<0.000000e+00> : vector<8x128xf32>
    %102 = tpu.matmul %99, %101, %cst_48 {dimension_numbers = #tpu.dot_dimension_numbers<[1], [0], [0], [1], [0, 0, 1, 1], [], []>} : vector<8x16xbf16>, vector<16x128xbf16>, vector<8x128xf32> -> vector<8x128xf32>
    %cst_49 = arith.constant dense<0xFF800000> : vector<8xf32>
    %103 = vector.multi_reduction <maximumf>, %102, %cst_49 [1] : vector<8x128xf32> to vector<8xf32>
    %104 = vector.shape_cast %103 : vector<8xf32> to vector<8x1xf32>
    %105 = arith.maximumf %100, %104 : vector<8x1xf32>
    %106 = arith.addf %85, %24 : vector<8x1xf32>
    %cst_50 = arith.constant 2.000000e+00 : f32
    %107 = vector.broadcast %cst_50 : f32 to vector<8x1xf32>
    %108 = arith.mulf %107, %105 : vector<8x1xf32>
    %109 = arith.subf %106, %108 : vector<8x1xf32>
    %cst_51 = arith.constant dense<0.000000e+00> : vector<1xf32>
    %110 = vector.multi_reduction <add>, %109, %cst_51 [0] : vector<8x1xf32> to vector<1xf32>
    %111 = vector.shape_cast %110 : vector<1xf32> to vector<1x1xf32>
    %112 = vector.shape_cast %111 : vector<1x1xf32> to vector<1x1x1xf32>
    %c0_52 = arith.constant 0 : index
    %c0_53 = arith.constant 0 : index
    %c0_54 = arith.constant 0 : index
    %113 = vector.load %arg4[%c0_52, %c0_53, %c0_54] : memref<1x1x1xf32, #tpu.memory_space<vmem>>, vector<1x1x1xf32>
    tpu.vector_store %arg4[%c0_52, %c0_53, %c0_54], %112 {strides = array<i32>} : memref<1x1x1xf32, #tpu.memory_space<vmem>>, vector<1x1x1xf32>,
    return
  }
  func.func @transform_0(%arg0: i32) -> (i32, i32, i32) {
    %c0_i32 = arith.constant 0 : i32
    %c0_i32_0 = arith.constant 0 : i32
    %c0_i32_1 = arith.constant 0 : i32
    return %c0_i32, %arg0, %c0_i32_0 : i32, i32, i32
  }
  func.func @transform_1(%arg0: i32) -> (i32, i32, i32) {
    %c0_i32 = arith.constant 0 : i32
    %c0_i32_0 = arith.constant 0 : i32
    %c0_i32_1 = arith.constant 0 : i32
    return %c0_i32, %arg0, %c0_i32_0 : i32, i32, i32
  }
  func.func @transform_2(%arg0: i32) -> (i32, i32) {
    %c0_i32 = arith.constant 0 : i32
    %c0_i32_0 = arith.constant 0 : i32
    %c0_i32_1 = arith.constant 0 : i32
    return %c0_i32, %c0_i32_0 : i32, i32
  }
  func.func @transform_3(%arg0: i32) -> (i32, i32, i32) {
    %c0_i32 = arith.constant 0 : i32
    %c0_i32_0 = arith.constant 0 : i32
    %c0_i32_1 = arith.constant 0 : i32
    return %arg0, %c0_i32, %c0_i32_0 : i32, i32, i32
  }
}

</mosaic_0001>

<llo_original>
// kernel: tpu_custom_call.1
$region0: #{tpu_custom_call.1}
  #allocation0 [shape = 'u32[]', space=smem, size = 0x4, offset = 0x4, fixed_abs, tag = 'smem constant byte address 0x4 - core index']
  #allocation1 [shape = 'u32[144,128]{1,0:T(1,128)}', space=vmem, size = 0x12000, scoped, tag = 'internal scratch']
  %s0 = inlined_call_operand.hbm [shape: f32[4,8,8], index: 0, kind: input, shape index: {}]
  %s1 = inlined_call_operand.hbm [shape: f32[4,8,8], index: 1, kind: input, shape index: {}]
  %s2 = inlined_call_operand.hbm [shape: bf16[16,128], index: 2, kind: input, shape index: {}]
  %s3 = inlined_call_operand.hbm [shape: f32[1,1,1], index: 3, kind: output, shape index: {}]
  %s4 = sld [smem:[#allocation0]]
  $region34: #{tpu_custom_call.1} parent=0
    _
  %s6 = ssub.s32 1, %s4
  %s7 = scalar_select 0, %s6, %s4
  $region1: #{tpu_custom_call.1} parent=0
    #allocation2 [shape = 'u8[16384]{0}', space=vmem, size = 0x4000, scoped, tag = 'input window, operand 0, single buffered']
    #allocation3 [shape = 's32[1]{0}', space=sflag, size = 0x4, scoped, tag = 'scoped memory for tpu_custom_call.1']
    #allocation4 [shape = 's32[1]{0}', space=sflag, size = 0x4, scoped, tag = 'scoped memory for tpu_custom_call.1']
    #allocation5 [shape = 'u8[16384]{0}', space=vmem, size = 0x4000, scoped, tag = 'input window, operand 1, single buffered']
    #allocation6 [shape = 's32[1]{0}', space=sflag, size = 0x4, scoped, tag = 'scoped memory for tpu_custom_call.1']
    #allocation7 [shape = 'u8[4096]{0}', space=vmem, size = 0x1000, scoped, tag = 'input window, operand 2, single buffered']
    #allocation8 [shape = 'u8[512]{0}', space=vmem, size = 0x400, scoped, tag = 'output window, operand 0, single buffered']
    %8 = vsyncpa [#allocation3], 0
    %9 = vsyncpa [#allocation6], 0
    %10 = vsyncpa [#allocation4], 0
    // Predicated region
    $region2: #{tpu_custom_call.1} parent=1 // pred_check
      _
    $region3: #{tpu_custom_call.1} parent=1 // pred_check_branch
      %12 = sbr.rel (0) target = $region5
    $region4: #{tpu_custom_call.1} parent=1 // pred_region
      %s14 = ssub.s32 512, 512
      %15 = vsyncadd [#allocation3], %s14
      %s16 = sshll.u32 [#allocation2], 4
      %s17 = int_to_ptr.vmem [resolvable:$true] %s16
      %22 = dma.hbm_to_vmem [thread:$0]  %s0, 512, %s17, [#allocation3], 128, 128, 8
    $region5: #{tpu_custom_call.1} parent=1 // pred_fallthru
      _
    // Predicated region
    $region6: #{tpu_custom_call.1} parent=1 // pred_check
      _
    $region7: #{tpu_custom_call.1} parent=1 // pred_check_branch
      %24 = sbr.rel (0) target = $region9
    $region8: #{tpu_custom_call.1} parent=1 // pred_region
      %s26 = ssub.s32 512, 512
      %27 = vsyncadd [#allocation6], %s26
      %s28 = sshll.u32 [#allocation5], 4
      %s29 = int_to_ptr.vmem [resolvable:$true] %s28
      %34 = dma.hbm_to_vmem [thread:$0]  %s1, 512, %s29, [#allocation6], 128, 128, 8
    $region9: #{tpu_custom_call.1} parent=1 // pred_fallthru
      _
    // Predicated region
    $region10: #{tpu_custom_call.1} parent=1 // pred_check
      _
    $region11: #{tpu_custom_call.1} parent=1 // pred_check_branch
      %36 = sbr.rel (0) target = $region13
    $region12: #{tpu_custom_call.1} parent=1 // pred_region
      %s38 = ssub.s32 128, 128
      %39 = vsyncadd [#allocation6], %s38
      %s40 = sshll.u32 [#allocation7], 4
      %s41 = int_to_ptr.vmem [resolvable:$true] %s40
      %46 = dma.hbm_to_vmem [thread:$0]  %s2, 128, %s41, [#allocation6], 64, 64, 4
    $region13: #{tpu_custom_call.1} parent=1 // pred_fallthru
      _
    // Predicated region
    $region14: #{tpu_custom_call.1} parent=1 // pred_check
      _
    $region15: #{tpu_custom_call.1} parent=1 // pred_check_branch
      %48 = sbr.rel (0) target = $region17
    $region16: #{tpu_custom_call.1} parent=1 // pred_region
      %49 = dma.done [#allocation3], 512
    $region17: #{tpu_custom_call.1} parent=1 // pred_fallthru
      _
    // Predicated region
    $region18: #{tpu_custom_call.1} parent=1 // pred_check
      _
    $region19: #{tpu_custom_call.1} parent=1 // pred_check_branch
      %51 = sbr.rel (0) target = $region21
    $region20: #{tpu_custom_call.1} parent=1 // pred_region
      %52 = dma.done [#allocation6], 512
    $region21: #{tpu_custom_call.1} parent=1 // pred_fallthru
      _
    // Predicated region
    $region22: #{tpu_custom_call.1} parent=1 // pred_check
      _
    $region23: #{tpu_custom_call.1} parent=1 // pred_check_branch
      %54 = sbr.rel (0) target = $region25
    $region24: #{tpu_custom_call.1} parent=1 // pred_region
      %55 = dma.done [#allocation6], 128
    $region25: #{tpu_custom_call.1} parent=1 // pred_fallthru
      _
    %v57 = vld [vmem:[#allocation5] sm:$0xff]
    %v58 = vmul.f32 %v57, %v57
    %vm59 = vcmask 64512
    %v60 = vsel %vm59, %v58, 0.0
    %61 = vadd.xlane.f32.xlu0 %v60
    %v62 = vpop.xlane.xlu0 %61
    %v63 = vadd.f32 %v62, 0.0
    %s64 = scalar_lea.vmem [#allocation5], 8
    %v65 = vld [vmem:[%s64] sm:$0xff]
    %v66 = vmul.f32 %v65, %v65
    %v67 = vsel %vm59, %v66, 0.0
    %68 = vadd.xlane.f32.xlu0 %v67
    %v69 = vpop.xlane.xlu0 %68
    %v70 = vadd.f32 %v63, %v69
    %s71 = scalar_lea.vmem [#allocation5], 16
    %v72 = vld [vmem:[%s71] sm:$0xff]
    %v73 = vmul.f32 %v72, %v72
    %v74 = vsel %vm59, %v73, 0.0
    %75 = vadd.xlane.f32.xlu0 %v74
    %v76 = vpop.xlane.xlu0 %75
    %v77 = vadd.f32 %v70, %v76
    %s78 = scalar_lea.vmem [#allocation5], 24
    %v79 = vld [vmem:[%s78] sm:$0xff]
    %v80 = vmul.f32 %v79, %v79
    %v81 = vsel %vm59, %v80, 0.0
    %82 = vadd.xlane.f32.xlu0 %v81
    %v83 = vpop.xlane.xlu0 %82
    %v84 = vadd.f32 %v77, %v83
    %v85 = vld [vmem:[#allocation2] sm:$0xff]
    %v86 = vmul.f32 %v85, %v85
    %v87 = vsel %vm59, %v86, 0.0
    %88 = vadd.xlane.f32.xlu0 %v87
    %v89 = vpop.xlane.xlu0 %88
    %v90 = vadd.f32 %v89, 0.0
    %v91 = vmul.f32 %v85, %v57
    %v92 = vsel %vm59, %v91, 0.0
    %93 = vadd.xlane.f32.xlu0 %v92
    %v94 = vpop.xlane.xlu0 %93
    %v95 = vmul.f32 %v85, %v65
    %v96 = vsel %vm59, %v95, 0.0
    %97 = vadd.xlane.f32.xlu0 %v96
    %v98 = vpop.xlane.xlu0 %97
    %v99 = vmul.f32 %v85, %v72
    %v100 = vsel %vm59, %v99, 0.0
    %101 = vadd.xlane.f32.xlu0 %v100
    %v102 = vpop.xlane.xlu0 %101
    %v103 = vmul.f32 %v85, %v79
    %v104 = vsel %vm59, %v103, 0.0
    %105 = vadd.xlane.f32.xlu0 %v104
    %v106 = vpop.xlane.xlu0 %105
    %s107 = scalar_lea.vmem [#allocation2], 8
    %v108 = vld [vmem:[%s107] sm:$0xff]
    %v109 = vmul.f32 %v108, %v108
    %v110 = vsel %vm59, %v109, 0.0
    %111 = vadd.xlane.f32.xlu0 %v110
    %v112 = vpop.xlane.xlu0 %111
    %v113 = vadd.f32 %v90, %v112
    %v114 = vmul.f32 %v108, %v57
    %v115 = vsel %vm59, %v114, 0.0
    %116 = vadd.xlane.f32.xlu0 %v115
    %v117 = vpop.xlane.xlu0 %116
    %v118 = vmul.f32 %v108, %v65
    %v119 = vsel %vm59, %v118, 0.0
    %120 = vadd.xlane.f32.xlu0 %v119
    %v121 = vpop.xlane.xlu0 %120
    %v122 = vmul.f32 %v108, %v72
    %v123 = vsel %vm59, %v122, 0.0
    %124 = vadd.xlane.f32.xlu0 %v123
    %v125 = vpop.xlane.xlu0 %124
    %v126 = vmul.f32 %v108, %v79
    %v127 = vsel %vm59, %v126, 0.0
    %128 = vadd.xlane.f32.xlu0 %v127
    %v129 = vpop.xlane.xlu0 %128
    %s130 = scalar_lea.vmem [#allocation2], 16
    %v131 = vld [vmem:[%s130] sm:$0xff]
    %v132 = vmul.f32 %v131, %v131
    %v133 = vsel %vm59, %v132, 0.0
    %134 = vadd.xlane.f32.xlu0 %v133
    %v135 = vpop.xlane.xlu0 %134
    %v136 = vadd.f32 %v113, %v135
    %v137 = vmul.f32 %v131, %v57
    %v138 = vsel %vm59, %v137, 0.0
    %139 = vadd.xlane.f32.xlu0 %v138
    %v140 = vpop.xlane.xlu0 %139
    %v141 = vmul.f32 %v131, %v65
    %v142 = vsel %vm59, %v141, 0.0
    %143 = vadd.xlane.f32.xlu0 %v142
    %v144 = vpop.xlane.xlu0 %143
    %v145 = vmul.f32 %v131, %v72
    %v146 = vsel %vm59, %v145, 0.0
    %147 = vadd.xlane.f32.xlu0 %v146
    %v148 = vpop.xlane.xlu0 %147
    %v149 = vmul.f32 %v131, %v79
    %v150 = vsel %vm59, %v149, 0.0
    %151 = vadd.xlane.f32.xlu0 %v150
    %v152 = vpop.xlane.xlu0 %151
    %s153 = scalar_lea.vmem [#allocation2], 24
    %v154 = vld [vmem:[%s153] sm:$0xff]
    %v155 = vmul.f32 %v154, %v154
    %v156 = vsel %vm59, %v155, 0.0
    %157 = vadd.xlane.f32.xlu0 %v156
    %v158 = vpop.xlane.xlu0 %157
    %v159 = vadd.f32 %v136, %v158
    %v160 = vmul.f32 %v154, %v57
    %v161 = vsel %vm59, %v160, 0.0
    %162 = vadd.xlane.f32.xlu0 %v161
    %v163 = vpop.xlane.xlu0 %162
    %v164 = vmul.f32 %v154, %v65
    %v165 = vsel %vm59, %v164, 0.0
    %166 = vadd.xlane.f32.xlu0 %v165
    %v167 = vpop.xlane.xlu0 %166
    %v168 = vmul.f32 %v154, %v72
    %v169 = vsel %vm59, %v168, 0.0
    %170 = vadd.xlane.f32.xlu0 %v169
    %v171 = vpop.xlane.xlu0 %170
    %v172 = vmul.f32 %v154, %v79
    %v173 = vsel %vm59, %v172, 0.0
    %174 = vadd.xlane.f32.xlu0 %v173
    %v175 = vpop.xlane.xlu0 %174
    %vm176 = vcmask 7168
    %v177 = vsel %vm176, %v94, %v98
    %vm178 = vcmask 15360
    %v179 = vsel %vm178, %v177, %v102
    %vm180 = vcmask 23552
    %v181 = vsel %vm180, %v179, %v106
    %vm182 = vcmask 31744
    %v183 = vsel %vm182, %v181, %v117
    %vm184 = vcmask 39936
    %v185 = vsel %vm184, %v183, %v121
    %vm186 = vcmask 48128
    %v187 = vsel %vm186, %v185, %v125
    %vm188 = vcmask 56320
    %v189 = vsel %vm188, %v187, %v129
    %v190 = vsel %vm59, %v189, %v140
    %vm191 = vcmask 72704
    %v192 = vsel %vm191, %v190, %v144
    %vm193 = vcmask 80896
    %v194 = vsel %vm193, %v192, %v148
    %vm195 = vcmask 89088
    %v196 = vsel %vm195, %v194, %v152
    %vm197 = vcmask 97280
    %v198 = vsel %vm197, %v196, %v163
    %vm199 = vcmask 105472
    %v200 = vsel %vm199, %v198, %v167
    %vm201 = vcmask 113664
    %v202 = vsel %vm201, %v200, %v171
    %vm203 = vcmask 121856
    %v204 = vsel %vm203, %v202, %v175
    %v205 = vpack.c.bf16 %v204, %v204
    %v206 = vld [vmem:[#allocation7] sm:$0xf]
    %v207 = vld [vmem:[#allocation7 + $0x4] sm:$0xf]
    %v210 = vunpack.c.l.b16 %v206
    %v211 = vunpack.c.l.b16 %v207
    %v212 = vpack.c.b16 %v211, %v210
    %vm214 = vcmask 130048
    %v216 = vsel %vm214, %v205, 0
    %218 = vmatprep.subr.bf16.mxu0 0
    %219 = vmatpush1.bf16.msra.mxu0 0
    %220 = vmatprep.subr.bf16.mxu0 0
    %221 = vmatpush1.bf16.msra.mxu0 0
    %222 = vmatprep.subr.bf16.mxu0 0
    %223 = vmatpush1.bf16.msra.mxu0 0
    %224 = vmatprep.subr.bf16.mxu0 0
    %225 = vmatpush1.bf16.msra.mxu0 0
    %226 = vmatprep.subr.bf16.mxu0 0
    %227 = vmatpush1.bf16.msra.mxu0 0
    %228 = vmatprep.subr.bf16.mxu0 0
    %229 = vmatpush1.bf16.msra.mxu0 0
    %230 = vmatprep.subr.bf16.mxu0 0
    %231 = vmatpush1.bf16.msra.mxu0 0
    %232 = vmatprep.subr.bf16.mxu0 0
    %233 = vmatpush1.bf16.msra.mxu0 %v212
    %234 = vmatprep.subr.bf16.mxu0 0
    %235 = vmatpush2.bf16.msra.mxu0 0
    %236 = vmatprep.subr.bf16.mxu0 0
    %237 = vmatpush2.bf16.msra.mxu0 0
    %238 = vmatprep.subr.bf16.mxu0 0
    %239 = vmatpush2.bf16.msra.mxu0 0
    %240 = vmatprep.subr.bf16.mxu0 0
    %241 = vmatpush2.bf16.msra.mxu0 0
    %242 = vmatprep.subr.bf16.mxu0 0
    %243 = vmatpush2.bf16.msra.mxu0 0
    %244 = vmatprep.subr.bf16.mxu0 0
    %245 = vmatpush2.bf16.msra.mxu0 0
    %246 = vmatprep.subr.bf16.mxu0 0
    %247 = vmatpush2.bf16.msra.mxu0 0
    %248 = vmatprep.subr.bf16.mxu0 0
    %249 = vmatpush2.bf16.msra.mxu0 0
    %250 = vmatprep.mubr.bf16.mxu0 0
    %251 = vmatmul.mubr.bf16.gmra.mxu0 %v216
    %v252 = vpop.f32.mrf.mxu0
    %v253 = vadd.f32 0.0, %v252
    %v254 = vpop.f32.mrf.mxu0
    %v255 = vpop.f32.mrf.mxu0
    %v256 = vpop.f32.mrf.mxu0
    %257 = vdwg.mxu0
    %258 = vmax.xlane.f32.xlu0 %v253
    %v259 = vpop.xlane.xlu0 %258
    %v260 = vadd.f32 %v159, %v84
    %v261 = vmul.f32 %v259, 2.0
    %v262 = vsub.f32 %v260, %v261
    %v263 = vrot.slane %v262, 4
    %v264 = vadd.f32 %v262, %v263
    %v265 = vrot.slane %v264, 2
    %v266 = vadd.f32 %v264, %v265
    %v267 = vrot.slane %v266, 1
    %v268 = vadd.f32 %v266, %v267
    %vm269 = vcmask 0
    %270 = vst.msk [vmem:[#allocation8] sm:$0x1] %vm269, %v268
    // Predicated region
    $region26: #{tpu_custom_call.1} parent=1 // pred_check
      _
    $region27: #{tpu_custom_call.1} parent=1 // pred_check_branch
      %272 = sbr.rel (0) target = $region29
    $region28: #{tpu_custom_call.1} parent=1 // pred_region
      %s274 = ssub.s32 16, 16
      %275 = vsyncadd [#allocation4], %s274
      %s277 = sshll.u32 [#allocation8], 4
      %s278 = int_to_ptr.vmem [resolvable:$true] %s277
      %280 = dma.vmem_to_hbm [thread:$0]  %s278, 16, %s3, [#allocation4]
    $region29: #{tpu_custom_call.1} parent=1 // pred_fallthru
      _
    // Predicated region
    $region30: #{tpu_custom_call.1} parent=1 // pred_check
      _
    $region31: #{tpu_custom_call.1} parent=1 // pred_check_branch
      %282 = sbr.rel (0) target = $region33
    $region32: #{tpu_custom_call.1} parent=1 // pred_region
      %283 = dma.done [#allocation4], 16
    $region33: #{tpu_custom_call.1} parent=1 // pred_fallthru
      _
    %284 = vsyncpa [#allocation3], 1
    %285 = vsyncpa [#allocation6], 1
    %286 = vsyncpa [#allocation4], 1

</llo_original>
